<compile_context>
chip_gen: v7x
topology: tpu7x:2x2x1
jax: 0.10.0
libtpu: 0.0.40
codegen_flags: <defaults>
</compile_context>

<pallas_src>
import functools

import jax
import jax.numpy as jnp
from jax.experimental import pallas as pl
from jax.experimental.pallas import tpu as pltpu


def _router_partials_kernel(logits_ref, idx_ref, z_ref, prob_ref, mask_ref, *, K):
    """One (group, token-tile) step: accumulate per-group partial sums into the output blocks."""
    t = pl.program_id(1)

    # Output blocks stay resident across the token (reduction) axis; zero them at t == 0.
    @pl.when(t == 0)
    def _():
        z_ref[...] = jnp.zeros_like(z_ref)
        prob_ref[...] = jnp.zeros_like(prob_ref)
        mask_ref[...] = jnp.zeros_like(mask_ref)

    logits = logits_ref[...]                                   # (TT, E)
    if logits.dtype != jnp.float32:                            # bf16 path: cast in-kernel only
        logits = logits.astype(jnp.float32)
    TT, E = logits.shape

    # --- z-loss pieces: sum of logsumexp(logits)^2 over this tile's tokens ---
    m = jnp.max(logits, axis=-1, keepdims=True)                # (TT, 1)
    ex = jnp.exp(logits - m)                                   # (TT, E)
    s = jnp.sum(ex, axis=-1, keepdims=True)                    # (TT, 1)
    lse = m + jnp.log(s)                                       # (TT, 1)
    z_ref[...] += jnp.sum(lse * lse)

    # --- softmax probs, summed over tokens per expert ---
    # TODO(synk): for small E (<128) only E of 128 lanes are active; lane-packing 128//E tokens per
    # row would improve VPU/EUP utilization, but the kernel is DMA/HBM-bound after the tiling fix.
    probs = ex / s                                             # (TT, E)
    prob_ref[...] += jnp.sum(probs, axis=0, keepdims=True)     # (1, E)

    # --- one-hot expert mask (max over the K selected experts), summed over tokens per expert ---
    idx = idx_ref[...]                                         # (TT, K) int32
    eids = jax.lax.broadcasted_iota(jnp.int32, (TT, E), 1)     # (TT, E)
    tok_mask = (idx[:, 0:1] == eids).astype(jnp.float32)
    for k in range(1, K):                                      # K is small & static
        tok_mask = jnp.maximum(tok_mask, (idx[:, k:k + 1] == eids).astype(jnp.float32))
    mask_ref[...] += jnp.sum(tok_mask, axis=0, keepdims=True)  # (1, E)


def _pick_token_tile(T, E, K, logits_itemsize, budget_bytes=16 * 1024 * 1024):
    """Largest token tile whose double-buffered, lane-padded VMEM footprint fits the budget."""
    lane_pad = lambda n: ((n + 127) // 128) * 128
    align = 16 if logits_itemsize < 4 else 8   # bf16 packs sublanes in pairs
    # per-token-row VMEM bytes of (logits block + idx block), x2 for double buffering
    row_bytes = (lane_pad(E) * logits_itemsize + lane_pad(K) * 4) * 2
    cap = max(align, budget_bytes // row_bytes)
    if T <= cap:
        return T                               # whole group in one block
    tt = (cap // align) * align
    while tt >= align:
        if T % tt == 0:
            return tt
        tt -= align
    raise ValueError(f"cannot find a token tile for T={T} (needs a divisor that is a multiple of {align})")


def _router_group_partials(logits, idx):
    """Per-layer Pallas call: returns (z_partial (G,1,1), prob_sum (G,1,E), mask_sum (G,1,E))."""
    G, T, E = logits.shape
    K = idx.shape[-1]
    TT = _pick_token_tile(T, E, K, jnp.dtype(logits.dtype).itemsize)

    kernel = functools.partial(_router_partials_kernel, K=K)
    return pl.pallas_call(
        kernel,
        out_shape=(
            jax.ShapeDtypeStruct((G, 1, 1), jnp.float32),   # sum over tokens of lse^2
            jax.ShapeDtypeStruct((G, 1, E), jnp.float32),   # sum over tokens of softmax probs
            jax.ShapeDtypeStruct((G, 1, E), jnp.float32),   # sum over tokens of expert one-hot mask
        ),
        grid_spec=pltpu.PrefetchScalarGridSpec(
            num_scalar_prefetch=0,
            grid=(G, T // TT),                               # token axis last (reduction)
            in_specs=[
                pl.BlockSpec((None, TT, E), lambda g, t: (g, t, 0)),
                pl.BlockSpec((None, TT, K), lambda g, t: (g, t, 0)),
            ],
            out_specs=(
                pl.BlockSpec((None, 1, 1), lambda g, t: (g, 0, 0)),
                pl.BlockSpec((None, 1, E), lambda g, t: (g, 0, 0)),
                pl.BlockSpec((None, 1, E), lambda g, t: (g, 0, 0)),
            ),
        ),
        compiler_params=pltpu.CompilerParams(
            dimension_semantics=("parallel", "arbitrary"),   # per-group outputs => g is safely parallel
            vmem_limit_bytes=32 * 1024 * 1024),
    )(logits, idx)


def switch_router_loss(router_outputs, z_loss_coef, aux_loss_coef):
    """JAX/Pallas equivalent of SwitchRouterLoss.forward(router_outputs)."""
    z_parts, prob_parts, mask_parts = [], [], []
    T_total = 0
    G = E = None
    for router_logits, expert_idx in router_outputs:
        if router_logits.ndim <= 1:           # mirrors _switch_unpack_router_logits filtering
            continue
        if expert_idx.ndim == 2:              # top-1 indices -> add K dim
            expert_idx = expert_idx[:, :, None]
        g, t, e = router_logits.shape
        if G is None:
            G, E = g, e
        assert (g, e) == (G, E), "all layers must share (num_groups, num_experts)"
        z, p, m = _router_group_partials(router_logits, expert_idx.astype(jnp.int32))
        z_parts.append(z)
        prob_parts.append(p)
        mask_parts.append(m)
        T_total += t

    # Final O(G*E) combine in plain JAX (equivalent to computing on the concatenated token axis).
    z_sum = sum(jnp.sum(z) for z in z_parts)                   # scalar
    prob_tot = sum(prob_parts)                                 # (G, 1, E)
    mask_tot = sum(mask_parts)                                 # (G, 1, E)

    z_loss = z_sum / float(G * T_total)
    tokens_per_expert = mask_tot / float(T_total)
    prob_per_expert = prob_tot / float(T_total)
    aux_loss = jnp.mean(tokens_per_expert * prob_per_expert) * float(E * E)
    return z_loss_coef * z_loss + aux_loss_coef * aux_loss


def _reference_loss(logits, idx, z_coef, aux_coef):
    """Pure-JAX reference mirroring the PyTorch module."""
    G, T, E = logits.shape
    lse = jax.scipy.special.logsumexp(logits, axis=-1)
    z_loss = jnp.sum(lse ** 2) / (G * T)
    probs = jax.nn.softmax(logits, axis=-1)
    mask = jnp.max(jax.nn.one_hot(idx, E, dtype=jnp.float32), axis=-2)  # (G, T, E)
    tokens_per = jnp.mean(mask, axis=-2)
    prob_per = jnp.mean(probs, axis=-2)
    aux = jnp.mean(tokens_per * prob_per) * (E ** 2)
    return z_coef * z_loss + aux_coef * aux


if __name__ == "__main__":
    # config (deterministic, in-script): coefficients from MixConfig
    z_loss_coef = 0.001
    aux_loss_coef = 0.002

    # small synthetic router outputs: 2 layers, G=2 groups, 32 tokens/layer, E=8 experts, top-2
    G, T_layer, E, K, n_layers = 2, 32, 8, 2, 2
    key = jax.random.PRNGKey(0)
    router_outputs = []
    for layer in range(n_layers):
        key, sub = jax.random.split(key)
        layer_logits = jax.random.normal(sub, (G, T_layer, E), dtype=jnp.float32)
        _, layer_idx = jax.lax.top_k(layer_logits, K)        # (G, T_layer, K) int32
        router_outputs.append((layer_logits, layer_idx))

    loss = switch_router_loss(router_outputs, z_loss_coef, aux_loss_coef)
    loss = jax.block_until_ready(loss)

    # correctness check against pure-JAX reference of the PyTorch semantics
    all_logits = jnp.concatenate([ro[0] for ro in router_outputs], axis=1)
    all_idx = jnp.concatenate([ro[1] for ro in router_outputs], axis=1)
    ref = _reference_loss(all_logits, all_idx, z_loss_coef, aux_loss_coef)
    assert abs(float(loss) - float(ref)) < 1e-5, (float(loss), float(ref))

    print("KERNEL_OK")
</pallas_src>

<mosaic_0001>
module attributes {stable_mosaic.version = 11 : i64} {
  func.func @_router_partials_kernel(%arg0: i32, %arg1: i32, %arg2: memref<1x32x8xf32, #tpu.memory_space<vmem>>, %arg3: memref<1x32x2xi32, #tpu.memory_space<vmem>>, %arg4: memref<1x1x1xf32, #tpu.memory_space<vmem>>, %arg5: memref<1x1x8xf32, #tpu.memory_space<vmem>>, %arg6: memref<1x1x8xf32, #tpu.memory_space<vmem>>) attributes {dimension_semantics = [#tpu.dimension_semantics<parallel>, #tpu.dimension_semantics<arbitrary>], iteration_bounds = array<i64: 2, 1>, scalar_prefetch = 0 : i64, scratch_operands = 0 : i64, tpu.core_type = #tpu.core_type<tc>, window_params = [{transform_indices = @transform_0, window_bounds = array<i64: 1, 32, 8>}, {transform_indices = @transform_1, window_bounds = array<i64: 1, 32, 2>}, {transform_indices = @transform_2, window_bounds = array<i64: 1, 1, 1>}, {transform_indices = @transform_3, window_bounds = array<i64: 1, 1, 8>}, {transform_indices = @transform_4, window_bounds = array<i64: 1, 1, 8>}]} {
    %c0_i32 = arith.constant 0 : i32
    %0 = arith.cmpi eq, %arg1, %c0_i32 : i32
    %1 = arith.extui %0 : i1 to i32
    %c0_i32_0 = arith.constant 0 : i32
    %2 = arith.cmpi ne, %1, %c0_i32_0 : i32
    scf.if %2 {
      %cst_28 = arith.constant 0.000000e+00 : f32
      %58 = vector.broadcast %cst_28 : f32 to vector<1x1xf32>
      %c0_29 = arith.constant 0 : index
      %c0_30 = arith.constant 0 : index
      %c0_31 = arith.constant 0 : index
      %59 = vector.load %arg4[%c0_29, %c0_30, %c0_31] : memref<1x1x1xf32, #tpu.memory_space<vmem>>, vector<1x1x1xf32>
      %60 = vector.shape_cast %59 : vector<1x1x1xf32> to vector<1x1xf32>
      %61 = vector.shape_cast %58 : vector<1x1xf32> to vector<1x1x1xf32>
      tpu.vector_store %arg4[%c0_29, %c0_30, %c0_31], %61 {strides = array<i32>} : memref<1x1x1xf32, #tpu.memory_space<vmem>>, vector<1x1x1xf32>,
      %cst_32 = arith.constant 0.000000e+00 : f32
      %62 = vector.broadcast %cst_32 : f32 to vector<1x8xf32>
      %c0_33 = arith.constant 0 : index
      %c0_34 = arith.constant 0 : index
      %c0_35 = arith.constant 0 : index
      %63 = vector.load %arg5[%c0_33, %c0_34, %c0_35] : memref<1x1x8xf32, #tpu.memory_space<vmem>>, vector<1x1x8xf32>
      %64 = vector.shape_cast %63 : vector<1x1x8xf32> to vector<1x8xf32>
      %65 = vector.shape_cast %62 : vector<1x8xf32> to vector<1x1x8xf32>
      tpu.vector_store %arg5[%c0_33, %c0_34, %c0_35], %65 {strides = array<i32>} : memref<1x1x8xf32, #tpu.memory_space<vmem>>, vector<1x1x8xf32>,
      %cst_36 = arith.constant 0.000000e+00 : f32
      %66 = vector.broadcast %cst_36 : f32 to vector<1x8xf32>
      %c0_37 = arith.constant 0 : index
      %c0_38 = arith.constant 0 : index
      %c0_39 = arith.constant 0 : index
      %67 = vector.load %arg6[%c0_37, %c0_38, %c0_39] : memref<1x1x8xf32, #tpu.memory_space<vmem>>, vector<1x1x8xf32>
      %68 = vector.shape_cast %67 : vector<1x1x8xf32> to vector<1x8xf32>
      %69 = vector.shape_cast %66 : vector<1x8xf32> to vector<1x1x8xf32>
      tpu.vector_store %arg6[%c0_37, %c0_38, %c0_39], %69 {strides = array<i32>} : memref<1x1x8xf32, #tpu.memory_space<vmem>>, vector<1x1x8xf32>,
    } else {
    }
    %c0 = arith.constant 0 : index
    %c0_1 = arith.constant 0 : index
    %c0_2 = arith.constant 0 : index
    %3 = vector.load %arg2[%c0, %c0_1, %c0_2] : memref<1x32x8xf32, #tpu.memory_space<vmem>>, vector<1x32x8xf32>
    %4 = vector.shape_cast %3 : vector<1x32x8xf32> to vector<32x8xf32>
    %cst = arith.constant dense<0xFF800000> : vector<32xf32>
    %5 = vector.multi_reduction <maximumf>, %4, %cst [1] : vector<32x8xf32> to vector<32xf32>
    %6 = vector.shape_cast %5 : vector<32xf32> to vector<32x1xf32>
    %7 = vector.broadcast %6 : vector<32x1xf32> to vector<32x8xf32>
    %8 = arith.subf %4, %7 : vector<32x8xf32>
    %9 = math.exp %8 : vector<32x8xf32>
    %cst_3 = arith.constant dense<0.000000e+00> : vector<32xf32>
    %10 = vector.multi_reduction <add>, %9, %cst_3 [1] : vector<32x8xf32> to vector<32xf32>
    %11 = vector.shape_cast %10 : vector<32xf32> to vector<32x1xf32>
    %12 = math.log %11 : vector<32x1xf32>
    %13 = arith.addf %6, %12 : vector<32x1xf32>
    %c0_4 = arith.constant 0 : index
    %c0_5 = arith.constant 0 : index
    %c0_6 = arith.constant 0 : index
    %14 = vector.load %arg4[%c0_4, %c0_5, %c0_6] : memref<1x1x1xf32, #tpu.memory_space<vmem>>, vector<1x1x1xf32>
    %15 = vector.shape_cast %14 : vector<1x1x1xf32> to vector<1x1xf32>
    %16 = arith.mulf %13, %13 : vector<32x1xf32>
    %17 = vector.shape_cast %16 : vector<32x1xf32> to vector<1x32x1xf32>
    %cst_7 = arith.constant dense<0.000000e+00> : vector<1xf32>
    %18 = vector.multi_reduction <add>, %17, %cst_7 [1, 2] : vector<1x32x1xf32> to vector<1xf32>
    %19 = vector.shape_cast %18 : vector<1xf32> to vector<1x1x1xf32>
    %20 = vector.extract %19[0, 0, 0] : f32 from vector<1x1x1xf32>
    %21 = vector.broadcast %20 : f32 to vector<1x1xf32>
    %22 = arith.addf %15, %21 : vector<1x1xf32>
    %c0_8 = arith.constant 0 : index
    %c0_9 = arith.constant 0 : index
    %c0_10 = arith.constant 0 : index
    %23 = vector.load %arg4[%c0_8, %c0_9, %c0_10] : memref<1x1x1xf32, #tpu.memory_space<vmem>>, vector<1x1x1xf32>
    %24 = vector.shape_cast %23 : vector<1x1x1xf32> to vector<1x1xf32>
    %25 = vector.shape_cast %22 : vector<1x1xf32> to vector<1x1x1xf32>
    tpu.vector_store %arg4[%c0_8, %c0_9, %c0_10], %25 {strides = array<i32>} : memref<1x1x1xf32, #tpu.memory_space<vmem>>, vector<1x1x1xf32>,
    %26 = vector.broadcast %11 : vector<32x1xf32> to vector<32x8xf32>
    %27 = arith.divf %9, %26 : vector<32x8xf32>
    %c0_11 = arith.constant 0 : index
    %c0_12 = arith.constant 0 : index
    %c0_13 = arith.constant 0 : index
    %28 = vector.load %arg5[%c0_11, %c0_12, %c0_13] : memref<1x1x8xf32, #tpu.memory_space<vmem>>, vector<1x1x8xf32>
    %29 = vector.shape_cast %28 : vector<1x1x8xf32> to vector<1x8xf32>
    %cst_14 = arith.constant dense<0.000000e+00> : vector<8xf32>
    %30 = vector.multi_reduction <add>, %27, %cst_14 [0] : vector<32x8xf32> to vector<8xf32>
    %31 = vector.shape_cast %30 : vector<8xf32> to vector<1x8xf32>
    %32 = arith.addf %29, %31 : vector<1x8xf32>
    %c0_15 = arith.constant 0 : index
    %c0_16 = arith.constant 0 : index
    %c0_17 = arith.constant 0 : index
    %33 = vector.load %arg5[%c0_15, %c0_16, %c0_17] : memref<1x1x8xf32, #tpu.memory_space<vmem>>, vector<1x1x8xf32>
    %34 = vector.shape_cast %33 : vector<1x1x8xf32> to vector<1x8xf32>
    %35 = vector.shape_cast %32 : vector<1x8xf32> to vector<1x1x8xf32>
    tpu.vector_store %arg5[%c0_15, %c0_16, %c0_17], %35 {strides = array<i32>} : memref<1x1x8xf32, #tpu.memory_space<vmem>>, vector<1x1x8xf32>,
    %c0_18 = arith.constant 0 : index
    %c0_19 = arith.constant 0 : index
    %c0_20 = arith.constant 0 : index
    %36 = vector.load %arg3[%c0_18, %c0_19, %c0_20] : memref<1x32x2xi32, #tpu.memory_space<vmem>>, vector<1x32x2xi32>
    %37 = vector.shape_cast %36 : vector<1x32x2xi32> to vector<32x2xi32>
    %38 = tpu.iota {dimensions = array<i32: 1>} : vector<32x8xi32>
    %39 = vector.extract_strided_slice %37 {offsets = [0, 0], sizes = [32, 1], strides = [1, 1]} : vector<32x2xi32> to vector<32x1xi32>
    %40 = vector.broadcast %39 : vector<32x1xi32> to vector<32x8xi32>
    %41 = arith.cmpi eq, %40, %38 : vector<32x8xi32>
    %42 = arith.extui %41 : vector<32x8xi1> to vector<32x8xi32>
    %43 = arith.sitofp %42 : vector<32x8xi32> to vector<32x8xf32>
    %44 = vector.extract_strided_slice %37 {offsets = [0, 1], sizes = [32, 1], strides = [1, 1]} : vector<32x2xi32> to vector<32x1xi32>
    %45 = vector.broadcast %44 : vector<32x1xi32> to vector<32x8xi32>
    %46 = arith.cmpi eq, %45, %38 : vector<32x8xi32>
    %47 = arith.extui %46 : vector<32x8xi1> to vector<32x8xi32>
    %48 = arith.sitofp %47 : vector<32x8xi32> to vector<32x8xf32>
    %49 = arith.maximumf %43, %48 : vector<32x8xf32>
    %c0_21 = arith.constant 0 : index
    %c0_22 = arith.constant 0 : index
    %c0_23 = arith.constant 0 : index
    %50 = vector.load %arg6[%c0_21, %c0_22, %c0_23] : memref<1x1x8xf32, #tpu.memory_space<vmem>>, vector<1x1x8xf32>
    %51 = vector.shape_cast %50 : vector<1x1x8xf32> to vector<1x8xf32>
    %cst_24 = arith.constant dense<0.000000e+00> : vector<8xf32>
    %52 = vector.multi_reduction <add>, %49, %cst_24 [0] : vector<32x8xf32> to vector<8xf32>
    %53 = vector.shape_cast %52 : vector<8xf32> to vector<1x8xf32>
    %54 = arith.addf %51, %53 : vector<1x8xf32>
    %c0_25 = arith.constant 0 : index
    %c0_26 = arith.constant 0 : index
    %c0_27 = arith.constant 0 : index
    %55 = vector.load %arg6[%c0_25, %c0_26, %c0_27] : memref<1x1x8xf32, #tpu.memory_space<vmem>>, vector<1x1x8xf32>
    %56 = vector.shape_cast %55 : vector<1x1x8xf32> to vector<1x8xf32>
    %57 = vector.shape_cast %54 : vector<1x8xf32> to vector<1x1x8xf32>
    tpu.vector_store %arg6[%c0_25, %c0_26, %c0_27], %57 {strides = array<i32>} : memref<1x1x8xf32, #tpu.memory_space<vmem>>, vector<1x1x8xf32>,
    return
  }
  func.func @transform_0(%arg0: i32, %arg1: i32) -> (i32, i32, i32) {
    %c0_i32 = arith.constant 0 : i32
    %c0_i32_0 = arith.constant 0 : i32
    return %arg0, %arg1, %c0_i32 : i32, i32, i32
  }
  func.func @transform_1(%arg0: i32, %arg1: i32) -> (i32, i32, i32) {
    %c0_i32 = arith.constant 0 : i32
    %c0_i32_0 = arith.constant 0 : i32
    return %arg0, %arg1, %c0_i32 : i32, i32, i32
  }
  func.func @transform_2(%arg0: i32, %arg1: i32) -> (i32, i32, i32) {
    %c0_i32 = arith.constant 0 : i32
    %c0_i32_0 = arith.constant 0 : i32
    %c0_i32_1 = arith.constant 0 : i32
    return %arg0, %c0_i32, %c0_i32_0 : i32, i32, i32
  }
  func.func @transform_3(%arg0: i32, %arg1: i32) -> (i32, i32, i32) {
    %c0_i32 = arith.constant 0 : i32
    %c0_i32_0 = arith.constant 0 : i32
    %c0_i32_1 = arith.constant 0 : i32
    return %arg0, %c0_i32, %c0_i32_0 : i32, i32, i32
  }
  func.func @transform_4(%arg0: i32, %arg1: i32) -> (i32, i32, i32) {
    %c0_i32 = arith.constant 0 : i32
    %c0_i32_0 = arith.constant 0 : i32
    %c0_i32_1 = arith.constant 0 : i32
    return %arg0, %c0_i32, %c0_i32_0 : i32, i32, i32
  }
}

</mosaic_0001>

<llo_original>
// kernel: tpu_custom_call.1
$region0: #{tpu_custom_call.1}
  #allocation0 [shape = 'u32[]', space=smem, size = 0x4, offset = 0x4, fixed_abs, tag = 'smem constant byte address 0x4 - core index']
  #allocation1 [shape = 'u32[144,128]{1,0:T(1,128)}', space=vmem, size = 0x12000, scoped, tag = 'internal scratch']
  %s0 = inlined_call_operand.vmem [shape: f32[2,32,8], index: 0, kind: input, shape index: {}]
  %s1 = inlined_call_operand.vmem [shape: s32[2,32,2], index: 1, kind: input, shape index: {}]
  %s2 = inlined_call_operand.vmem [shape: f32[2,1,1], index: 2, kind: output, shape index: {0}]
  %s3 = inlined_call_operand.hbm [shape: f32[2,1,8], index: 3, kind: output, shape index: {1}]
  %s4 = inlined_call_operand.hbm [shape: f32[2,1,8], index: 4, kind: output, shape index: {2}]
  %5 = xla_tuple %s2, %s3, %s4
  %s6 = sld [smem:[#allocation0]]
  $region61: #{tpu_custom_call.1} parent=0
    _
  %s8 = ssub.s32 1, %s6
  %s9 = scalar_select 0, %s8, %s6
  $region1: #{tpu_custom_call.1} parent=0
    #allocation2 [shape = 'u8[1024]{0}', space=vmem, size = 0x400, scoped, tag = 'output window, operand 1']
    #allocation3 [shape = 's32[2]{0}', space=sflag, size = 0x8, scoped, tag = 'scoped memory for tpu_custom_call.1']
    #allocation4 [shape = 'u8[1024]{0}', space=vmem, size = 0x400, scoped, tag = 'output window, operand 2']
    #allocation5 [shape = 's32[2]{0}', space=sflag, size = 0x8, scoped, tag = 'scoped memory for tpu_custom_call.1']
    %10 = vsyncpa [#allocation3], 0
    %s11 = scalar_lea.sflag [#allocation3], 1
    %12 = vsyncpa %s11, 0
    %13 = vsyncpa [#allocation5], 0
    %s14 = scalar_lea.sflag [#allocation5], 1
    %15 = vsyncpa %s14, 0
    loop: start=0, step=1, limit=4
    $region2: #{tpu_custom_call.1} parent=1 // loop_pre_header
      _
    $region3: #{tpu_custom_call.1} parent=1 // loop_header
      %s17 = sphi 0, %s21
      %p18 = scmp.ge.s32.totalorder %s17, 4
      %s24 = sphi 0, %s36
      %s25 = sphi 0, %s32
      %s26 = sphi 0, %s24
      %s27 = sphi 0, %s25
      %s28 = sphi 0, %s26
      %s29 = sphi 0, %s27
      %s41 = sphi 0, %s43
      %s44 = sphi 0, %s41
      %s45 = sphi 0, %s44
      %s61 = sphi 0, %s45
      %s69 = sphi 0, %s71
      %s72 = sphi 0, %s69
      %s73 = sphi 0, %s72
      %s89 = sphi 0, %s73
      %s95 = sphi 0, %s97
      %s98 = sphi 0, %s95
      %s99 = sphi 0, %s98
      %s115 = sphi 0, %s99
      %s121 = sphi 0, %s123
      %s124 = sphi 0, %s121
      %s125 = sphi 0, %s124
      %s141 = sphi 0, %s125
      %s147 = sphi 0, %s149
      %s150 = sphi 0, %s147
      %s151 = sphi 0, %s150
      %s167 = sphi 0, %s151
    $region4: #{tpu_custom_call.1} parent=1 // loop_header_branch
      %20 = sbr.rel (%p18) target = $region8
    $region5: #{tpu_custom_call.1} parent=1 // loop_body
      %s22 = ssub.s32 %s17, 1
      %s23 = ssub.s32 %s17, 2
      %s30 = sadd.s32 1, %s25
      %p31 = scmp.ge.s32.totalorder %s30, 1
      %s32 = scalar_select %p31, 0, %s30
      %s33 = sadd.s32 1, %s24
      %s34 = scalar_select %p31, %s33, %s24
      %p35 = scmp.ge.s32.totalorder %s34, 2
      %s36 = scalar_select %p35, 0, %s34
      %s37 = ssub.s32 %s24, %s36
      %s38 = ssub.s32 %s25, %s32
      %s39 = sor.u32 %s37, %s38
      %p40 = scmp.eq.s32.totalorder %s39, 0
      %s42 = sadd.s32 %s41, 1
      %s43 = scalar_select %p40, %s41, %s42
      %p46 = pneg %p40
      %p47 = scmp.eq.s32.totalorder %s17, 1
      %p48 = por %p46, %p47
      %p49 = scmp.ne.s32.totalorder %s41, %s44
      %p50 = scmp.eq.s32.totalorder %s17, 0
      %p51 = por %p49, %p50
      %p52 = scmp.ne.s32.totalorder %s41, %s44
      %p53 = scmp.eq.s32.totalorder %s22, 1
      %p54 = por %p52, %p53
      %p55 = scmp.ne.s32.totalorder %s44, %s45
      %p56 = scmp.eq.s32.totalorder %s22, 0
      %p57 = por %p55, %p56
      %p58 = scmp.ne.s32.totalorder %s44, %s45
      %p59 = scmp.eq.s32.totalorder %s23, 1
      %p60 = por %p58, %p59
      %p62 = scmp.ne.s32.totalorder %s45, %s61
      %p63 = scmp.eq.s32.totalorder %s23, 0
      %p64 = por %p62, %p63
      %s65 = ssub.s32 %s24, %s36
      %s66 = ssub.s32 %s25, %s32
      %s67 = sor.u32 %s65, %s66
      %p68 = scmp.eq.s32.totalorder %s67, 0
      %s70 = sadd.s32 %s69, 1
      %s71 = scalar_select %p68, %s69, %s70
      %p74 = pneg %p68
      %p75 = scmp.eq.s32.totalorder %s17, 1
      %p76 = por %p74, %p75
      %p77 = scmp.ne.s32.totalorder %s69, %s72
      %p78 = scmp.eq.s32.totalorder %s17, 0
      %p79 = por %p77, %p78
      %p80 = scmp.ne.s32.totalorder %s69, %s72
      %p81 = scmp.eq.s32.totalorder %s22, 1
      %p82 = por %p80, %p81
      %p83 = scmp.ne.s32.totalorder %s72, %s73
      %p84 = scmp.eq.s32.totalorder %s22, 0
      %p85 = por %p83, %p84
      %p86 = scmp.ne.s32.totalorder %s72, %s73
      %p87 = scmp.eq.s32.totalorder %s23, 1
      %p88 = por %p86, %p87
      %p90 = scmp.ne.s32.totalorder %s73, %s89
      %p91 = scmp.eq.s32.totalorder %s23, 0
      %p92 = por %p90, %p91
      %s93 = ssub.s32 %s24, %s36
      %p94 = scmp.eq.s32.totalorder %s93, 0
      %s96 = sadd.s32 %s95, 1
      %s97 = scalar_select %p94, %s95, %s96
      %p100 = pneg %p94
      %p101 = scmp.eq.s32.totalorder %s17, 1
      %p102 = por %p100, %p101
      %p103 = scmp.ne.s32.totalorder %s95, %s98
      %p104 = scmp.eq.s32.totalorder %s17, 0
      %p105 = por %p103, %p104
      %p106 = scmp.ne.s32.totalorder %s95, %s98
      %p107 = scmp.eq.s32.totalorder %s22, 1
      %p108 = por %p106, %p107
      %p109 = scmp.ne.s32.totalorder %s98, %s99
      %p110 = scmp.eq.s32.totalorder %s22, 0
      %p111 = por %p109, %p110
      %p112 = scmp.ne.s32.totalorder %s98, %s99
      %p113 = scmp.eq.s32.totalorder %s23, 1
      %p114 = por %p112, %p113
      %p116 = scmp.ne.s32.totalorder %s99, %s115
      %p117 = scmp.eq.s32.totalorder %s23, 0
      %p118 = por %p116, %p117
      %s119 = ssub.s32 %s24, %s36
      %p120 = scmp.eq.s32.totalorder %s119, 0
      %s122 = sadd.s32 %s121, 1
      %s123 = scalar_select %p120, %s121, %s122
      %p126 = pneg %p120
      %p127 = scmp.eq.s32.totalorder %s17, 1
      %p128 = por %p126, %p127
      %p129 = scmp.ne.s32.totalorder %s121, %s124
      %p130 = scmp.eq.s32.totalorder %s17, 0
      %p131 = por %p129, %p130
      %p132 = scmp.ne.s32.totalorder %s121, %s124
      %p133 = scmp.eq.s32.totalorder %s22, 1
      %p134 = por %p132, %p133
      %p135 = scmp.ne.s32.totalorder %s124, %s125
      %p136 = scmp.eq.s32.totalorder %s22, 0
      %p137 = por %p135, %p136
      %p138 = scmp.ne.s32.totalorder %s124, %s125
      %p139 = scmp.eq.s32.totalorder %s23, 1
      %p140 = por %p138, %p139
      %p142 = scmp.ne.s32.totalorder %s125, %s141
      %p143 = scmp.eq.s32.totalorder %s23, 0
      %p144 = por %p142, %p143
      %s145 = ssub.s32 %s24, %s36
      %p146 = scmp.eq.s32.totalorder %s145, 0
      %s148 = sadd.s32 %s147, 1
      %s149 = scalar_select %p146, %s147, %s148
      %p152 = pneg %p146
      %p153 = scmp.eq.s32.totalorder %s17, 1
      %p154 = por %p152, %p153
      %p155 = scmp.ne.s32.totalorder %s147, %s150
      %p156 = scmp.eq.s32.totalorder %s17, 0
      %p157 = por %p155, %p156
      %p158 = scmp.ne.s32.totalorder %s147, %s150
      %p159 = scmp.eq.s32.totalorder %s22, 1
      %p160 = por %p158, %p159
      %p161 = scmp.ne.s32.totalorder %s150, %s151
      %p162 = scmp.eq.s32.totalorder %s22, 0
      %p163 = por %p161, %p162
      %p164 = scmp.ne.s32.totalorder %s150, %s151
      %p165 = scmp.eq.s32.totalorder %s23, 1
      %p166 = por %p164, %p165
      %p168 = scmp.ne.s32.totalorder %s151, %s167
      %p169 = scmp.eq.s32.totalorder %s23, 0
      %p170 = por %p168, %p169
      %p171 = scmp.le.s32.totalorder 1, %s17
      %p172 = scmp.lt.s32.totalorder %s17, 3
      %p173 = pnand %p171, %p172
      %p174 = pneg %p173
      // Predicated region
      $region9: #{tpu_custom_call.1} parent=5 // pred_check
        _
      $region10: #{tpu_custom_call.1} parent=5 // pred_check_branch
        %176 = sbr.rel (%p173) target = $region12
      $region11: #{tpu_custom_call.1} parent=5 // pred_region
        %s177 = ssub.s32 %s17, 1
      $region12: #{tpu_custom_call.1} parent=5 // pred_fallthru
        _
      %p178 = scmp.lt.s32.totalorder %s17, 2
      // Predicated region
      $region13: #{tpu_custom_call.1} parent=5 // pred_check
        %p179 = pneg %p178
      $region14: #{tpu_custom_call.1} parent=5 // pred_check_branch
        %181 = sbr.rel (%p179) target = $region16
      $region15: #{tpu_custom_call.1} parent=5 // pred_region
        // Predicated region
        $region17: #{tpu_custom_call.1} parent=15 // pred_check
          %p182 = pneg %p51
        $region18: #{tpu_custom_call.1} parent=15 // pred_check_branch
          %184 = sbr.rel (%p182) target = $region20
        $region19: #{tpu_custom_call.1} parent=15 // pred_region
          %s185 = smul.u32 4, %s25
          %p186 = scmp.lt.s32.totalorder %s24, 1
          %s187 = scalar_select %p186, %s24, 1
          %p188 = scmp.lt.s32.totalorder %s185, 3
          %s189 = scalar_select %p188, %s185, 3
          %s190 = smul.addr %s187, 4
          %s191 = sadd.s32 %s189, %s190
          %s192 = smul.addr %s191, 8
          %s193 = scalar_lea.vmem %s0, %s192
          %s194 = smul.u32 4, %s25
        $region20: #{tpu_custom_call.1} parent=15 // pred_fallthru
          _
        // Predicated region
        $region21: #{tpu_custom_call.1} parent=15 // pred_check
          %p195 = pneg %p79
        $region22: #{tpu_custom_call.1} parent=15 // pred_check_branch
          %197 = sbr.rel (%p195) target = $region24
        $region23: #{tpu_custom_call.1} parent=15 // pred_region
          %s198 = smul.u32 4, %s25
          %p199 = scmp.lt.s32.totalorder %s24, 1
          %s200 = scalar_select %p199, %s24, 1
          %p201 = scmp.lt.s32.totalorder %s198, 3
          %s202 = scalar_select %p201, %s198, 3
          %s203 = smul.addr %s200, 4
          %s204 = sadd.s32 %s202, %s203
          %s205 = smul.addr %s204, 8
          %s206 = scalar_lea.vmem %s1, %s205
          %s207 = smul.u32 4, %s25
        $region24: #{tpu_custom_call.1} parent=15 // pred_fallthru
          _
      $region16: #{tpu_custom_call.1} parent=5 // pred_fallthru
        _
      %p208 = scmp.le.s32.totalorder 1, %s17
      %p209 = scmp.lt.s32.totalorder %s17, 3
      %p210 = pnand %p208, %p209
      %p211 = pneg %p210
      // Predicated region
      $region25: #{tpu_custom_call.1} parent=5 // pred_check
        _
      $region26: #{tpu_custom_call.1} parent=5 // pred_check_branch
        %213 = sbr.rel (%p210) target = $region28
      $region27: #{tpu_custom_call.1} parent=5 // pred_region
        %s214 = ssub.s32 %s17, 1
        %s215 = smul.u32 4, %s27
        %p216 = scmp.lt.s32.totalorder %s26, 1
        %s217 = scalar_select %p216, %s26, 1
        %p218 = scmp.lt.s32.totalorder %s215, 3
        %s219 = scalar_select %p218, %s215, 3
        %s220 = smul.addr %s217, 4
        %s221 = sadd.s32 %s219, %s220
        %s222 = smul.addr %s221, 8
        %s223 = scalar_lea.vmem %s0, %s222
        %p224 = pneg %p57
        %p225 = pneg %p54
        %s226 = smul.u32 4, %s27
        %p227 = scmp.lt.s32.totalorder %s26, 1
        %s228 = scalar_select %p227, %s26, 1
        %p229 = scmp.lt.s32.totalorder %s226, 3
        %s230 = scalar_select %p229, %s226, 3
        %s231 = smul.addr %s228, 4
        %s232 = sadd.s32 %s230, %s231
        %s233 = smul.addr %s232, 8
        %s234 = scalar_lea.vmem %s1, %s233
        %p235 = pneg %p85
        %p236 = pneg %p82
        %p237 = pneg %p111
        %p238 = pneg %p108
        %p239 = scmp.lt.s32.totalorder %s26, 1
        %s240 = scalar_select %p239, %s26, 1
        %s241 = scalar_lea.vmem %s2, %s240
        %p242 = pneg %p137
        %p243 = pneg %p134
        %s244 = sand.u32 %s124, 1
        %s245 = scalar_lea.sflag [#allocation3], %s244
        %s246 = sand.u32 %s124, 1
        %s247 = scalar_lea.vmem [#allocation2], %s246
        %p248 = pneg %p163
        %p249 = pneg %p160
        %s250 = sand.u32 %s150, 1
        %s251 = scalar_lea.sflag [#allocation5], %s250
        %s252 = sand.u32 %s150, 1
        %s253 = scalar_lea.vmem [#allocation4], %s252
        %s254 = smul.u32 4, %s27
        %p255 = scmp.lt.s32.totalorder %s26, 1
        %s256 = scalar_select %p255, %s26, 1
        %p257 = scmp.lt.s32.totalorder %s254, 3
        %s258 = scalar_select %p257, %s254, 3
        %s259 = smul.addr %s256, 4
        %s260 = sadd.s32 %s258, %s259
        %s261 = smul.addr %s260, 8
        %s262 = scalar_lea.vmem %s0, %s261
        %s263 = smul.u32 4, %s27
        %s264 = smul.u32 4, %s27
        %p265 = scmp.lt.s32.totalorder %s26, 1
        %s266 = scalar_select %p265, %s26, 1
        %p267 = scmp.lt.s32.totalorder %s264, 3
        %s268 = scalar_select %p267, %s264, 3
        %s269 = smul.addr %s266, 4
        %s270 = sadd.s32 %s268, %s269
        %s271 = smul.addr %s270, 8
        %s272 = scalar_lea.vmem %s1, %s271
        %s273 = smul.u32 4, %s27
        %p274 = scmp.lt.s32.totalorder %s26, 1
        %s275 = scalar_select %p274, %s26, 1
        %s276 = scalar_lea.vmem %s2, %s275
        %p277 = scmp.eq.s32.totalorder %s27, 0
        // Predicated region
        $region29: #{tpu_custom_call.1} parent=27 // pred_check
          %p278 = pneg %p277
        $region30: #{tpu_custom_call.1} parent=27 // pred_check_branch
          %280 = sbr.rel (%p278) target = $region32
        $region31: #{tpu_custom_call.1} parent=27 // pred_region
          %vm281 = vcmask 0
          %282 = vst.msk [vmem:[%s276] sm:$0x1] %vm281, 0.0
          %vm283 = vcmask 57344
          %284 = vst.msk [vmem:[%s247] sm:$0x1] %vm283, 0.0
          %285 = vst.msk [vmem:[%s253] sm:$0x1] %vm283, 0.0
        $region32: #{tpu_custom_call.1} parent=27 // pred_fallthru
          _
        %v286 = vld [vmem:[%s262] sm:$0xff]
        %v287 = vld [vmem:[%s262 + $0x8] sm:$0xff]
        %v288 = vld [vmem:[%s262 + $0x10] sm:$0xff]
        %v289 = vld [vmem:[%s262 + $0x18] sm:$0xff]
        %vm290 = vcmask 64512
        %v291 = vsel %vm290, %v286, -inf
        %292 = vmax.xlane.f32.xlu0 %v291
        %v293 = vpop.xlane.xlu0 %292
        %v294 = vsel %vm290, %v287, -inf
        %295 = vmax.xlane.f32.xlu0 %v294
        %v296 = vpop.xlane.xlu0 %295
        %v297 = vsel %vm290, %v288, -inf
        %298 = vmax.xlane.f32.xlu0 %v297
        %v299 = vpop.xlane.xlu0 %298
        %v300 = vsel %vm290, %v289, -inf
        %301 = vmax.xlane.f32.xlu0 %v300
        %v302 = vpop.xlane.xlu0 %301
        %v303 = vsub.f32 %v286, %v293
        %v304 = vsub.f32 %v287, %v296
        %v305 = vsub.f32 %v288, %v299
        %v306 = vsub.f32 %v289, %v302
        %v307 = vmul.f32 %v303, 1.442695
        %v308 = vpow.pop %v307
        %v309 = vmul.f32 %v304, 1.442695
        %v310 = vpow.pop %v309
        %v311 = vmul.f32 %v305, 1.442695
        %v312 = vpow.pop %v311
        %v313 = vmul.f32 %v306, 1.442695
        %v314 = vpow.pop %v313
        %v315 = vsel %vm290, %v308, 0.0
        %316 = vadd.xlane.f32.xlu0 %v315
        %v317 = vpop.xlane.xlu0 %316
        %v318 = vsel %vm290, %v310, 0.0
        %319 = vadd.xlane.f32.xlu0 %v318
        %v320 = vpop.xlane.xlu0 %319
        %v321 = vsel %vm290, %v312, 0.0
        %322 = vadd.xlane.f32.xlu0 %v321
        %v323 = vpop.xlane.xlu0 %322
        %v324 = vsel %vm290, %v314, 0.0
        %325 = vadd.xlane.f32.xlu0 %v324
        %v326 = vpop.xlane.xlu0 %325
        %v327 = vlog2.pop %v317
        %v328 = vmul.f32 %v327, 0.6931472
        %v329 = vlog2.pop %v320
        %v330 = vmul.f32 %v329, 0.6931472
        %v331 = vlog2.pop %v323
        %v332 = vmul.f32 %v331, 0.6931472
        %v333 = vlog2.pop %v326
        %v334 = vmul.f32 %v333, 0.6931472
        %v335 = vadd.f32 %v293, %v328
        %v336 = vadd.f32 %v296, %v330
        %v337 = vadd.f32 %v299, %v332
        %v338 = vadd.f32 %v302, %v334
        %v339 = vld [vmem:[%s276] sm:$0x1]
        %v340 = vmul.f32 %v335, %v335
        %v341 = vmul.f32 %v336, %v336
        %v342 = vmul.f32 %v337, %v337
        %v343 = vmul.f32 %v338, %v338
        %vm344 = vcmask 7168
        %v345 = vsel %vm344, %v340, 0.0
        %v346 = vsel %vm344, %v341, 0.0
        %v347 = vadd.f32 %v345, %v346
        %v348 = vsel %vm344, %v342, 0.0
        %v349 = vadd.f32 %v347, %v348
        %v350 = vsel %vm344, %v343, 0.0
        %v351 = vadd.f32 %v349, %v350
        %352 = vadd.xlane.f32.xlu0 %v351
        %v353 = vpop.xlane.xlu0 %352
        %v354 = vrot.slane %v353, 4
        %v355 = vadd.f32 %v353, %v354
        %v356 = vrot.slane %v355, 2
        %v357 = vadd.f32 %v355, %v356
        %v358 = vrot.slane %v357, 1
        %v359 = vadd.f32 %v357, %v358
        %s360 = vtos %v359
        %v361 = vstv %s360
        %v362 = vadd.f32 %v339, %v361
        %vm363 = vcmask 0
        %364 = vst.msk [vmem:[%s276] sm:$0x1] %vm363, %v362
        %v365 = vrcp.pop %v317
        %v366 = vmul.f32 %v308, %v365
        %v367 = vrcp.pop %v320
        %v368 = vmul.f32 %v310, %v367
        %v369 = vrcp.pop %v323
        %v370 = vmul.f32 %v312, %v369
        %v371 = vrcp.pop %v326
        %v372 = vmul.f32 %v314, %v371
        %v373 = vld [vmem:[%s247] sm:$0x1]
        %v374 = vsel %vm290, %v366, 0.0
        %v375 = vsel %vm290, %v368, 0.0
        %v376 = vadd.f32 %v374, %v375
        %v377 = vsel %vm290, %v370, 0.0
        %v378 = vadd.f32 %v376, %v377
        %v379 = vsel %vm290, %v372, 0.0
        %v380 = vadd.f32 %v378, %v379
        %v381 = vrot.slane %v380, 4
        %v382 = vadd.f32 %v380, %v381
        %v383 = vrot.slane %v382, 2
        %v384 = vadd.f32 %v382, %v383
        %v385 = vrot.slane %v384, 1
        %v386 = vadd.f32 %v384, %v385
        %v387 = vadd.f32 %v373, %v386
        %vm388 = vcmask 57344
        %389 = vst.msk [vmem:[%s247] sm:$0x1] %vm388, %v387
        %v390 = vld [vmem:[%s272] sm:$0xff]
        %v391 = vld [vmem:[%s272 + $0x8] sm:$0xff]
        %v392 = vld [vmem:[%s272 + $0x10] sm:$0xff]
        %v393 = vld [vmem:[%s272 + $0x18] sm:$0xff]
        %v394 = vlaneseq
        %v395 = vand.u32 %v394, 127
        %396 = vset.pattern.permute.xlu0 0
        %397 = vperm.xlu0 %396, %v390
        %v398 = vpop.permute.xlu0 %397
        %399 = vset.pattern.permute.xlu0 0
        %400 = vperm.xlu0 %399, %v391
        %v401 = vpop.permute.xlu0 %400
        %402 = vset.pattern.permute.xlu0 0
        %403 = vperm.xlu0 %402, %v392
        %v404 = vpop.permute.xlu0 %403
        %405 = vset.pattern.permute.xlu0 0
        %406 = vperm.xlu0 %405, %v393
        %v407 = vpop.permute.xlu0 %406
        %vm408 = vcmp.eq.s32.totalorder %v398, %v395
        %vm409 = vcmp.eq.s32.totalorder %v401, %v395
        %vm410 = vcmp.eq.s32.totalorder %v404, %v395
        %vm411 = vcmp.eq.s32.totalorder %v407, %v395
        %v412 = vsel %vm408, 1, 0
        %v413 = vsel %vm409, 1, 0
        %v414 = vsel %vm410, 1, 0
        %v415 = vsel %vm411, 1, 0
        %v416 = vcvt.s32.f32 %v412
        %v417 = vcvt.s32.f32 %v413
        %v418 = vcvt.s32.f32 %v414
        %v419 = vcvt.s32.f32 %v415
        %420 = vset.pattern.permute.xlu0 1
        %421 = vperm.xlu0 %420, %v390
        %v422 = vpop.permute.xlu0 %421
        %423 = vset.pattern.permute.xlu0 1
        %424 = vperm.xlu0 %423, %v391
        %v425 = vpop.permute.xlu0 %424
        %426 = vset.pattern.permute.xlu0 1
        %427 = vperm.xlu0 %426, %v392
        %v428 = vpop.permute.xlu0 %427
        %429 = vset.pattern.permute.xlu0 1
        %430 = vperm.xlu0 %429, %v393
        %v431 = vpop.permute.xlu0 %430
        %vm432 = vcmp.eq.s32.totalorder %v422, %v395
        %vm433 = vcmp.eq.s32.totalorder %v425, %v395
        %vm434 = vcmp.eq.s32.totalorder %v428, %v395
        %vm435 = vcmp.eq.s32.totalorder %v431, %v395
        %v436 = vsel %vm432, 1, 0
        %v437 = vsel %vm433, 1, 0
        %v438 = vsel %vm434, 1, 0
        %v439 = vsel %vm435, 1, 0
        %v440 = vcvt.s32.f32 %v436
        %v441 = vcvt.s32.f32 %v437
        %v442 = vcvt.s32.f32 %v438
        %v443 = vcvt.s32.f32 %v439
        %v444 = vmax.f32 %v416, %v440
        %v445 = vmax.f32 %v417, %v441
        %v446 = vmax.f32 %v418, %v442
        %v447 = vmax.f32 %v419, %v443
        %v448 = vld [vmem:[%s253] sm:$0x1]
        %v449 = vsel %vm290, %v444, 0.0
        %v450 = vsel %vm290, %v445, 0.0
        %v451 = vadd.f32 %v449, %v450
        %v452 = vsel %vm290, %v446, 0.0
        %v453 = vadd.f32 %v451, %v452
        %v454 = vsel %vm290, %v447, 0.0
        %v455 = vadd.f32 %v453, %v454
        %v456 = vrot.slane %v455, 4
        %v457 = vadd.f32 %v455, %v456
        %v458 = vrot.slane %v457, 2
        %v459 = vadd.f32 %v457, %v458
        %v460 = vrot.slane %v459, 1
        %v461 = vadd.f32 %v459, %v460
        %v462 = vadd.f32 %v448, %v461
        %463 = vst.msk [vmem:[%s253] sm:$0x1] %vm388, %v462
        %p464 = scmp.lt.s32.totalorder %s26, 1
        %s465 = scalar_select %p464, %s26, 1
        %s466 = scalar_lea.vmem %s2, %s465
        %s467 = sand.u32 %s124, 1
        %s468 = scalar_lea.sflag [#allocation3], %s467
        %s469 = sand.u32 %s124, 1
        %s470 = scalar_lea.vmem [#allocation2], %s469
        %s471 = sand.u32 %s150, 1
        %s472 = scalar_lea.sflag [#allocation5], %s471
        %s473 = sand.u32 %s150, 1
        %s474 = scalar_lea.vmem [#allocation4], %s473
        // Predicated region
        $region33: #{tpu_custom_call.1} parent=27 // pred_check
          %p475 = pneg %p108
        $region34: #{tpu_custom_call.1} parent=27 // pred_check_branch
          %477 = sbr.rel (%p475) target = $region36
        $region35: #{tpu_custom_call.1} parent=27 // pred_region
          _
        $region36: #{tpu_custom_call.1} parent=27 // pred_fallthru
          _
        // Predicated region
        $region37: #{tpu_custom_call.1} parent=27 // pred_check
          %p478 = pneg %p134
        $region38: #{tpu_custom_call.1} parent=27 // pred_check_branch
          %480 = sbr.rel (%p478) target = $region40
        $region39: #{tpu_custom_call.1} parent=27 // pred_region
          %s482 = ssub.s32 16, 16
          %483 = vsyncadd %s468, %s482
          %s484 = smul.addr %s26, 16
          %s485 = scalar_lea.hbm %s3, %s484
          %s487 = sshll.u32 %s470, 4
          %s488 = int_to_ptr.vmem [resolvable:$true] %s487
          %490 = dma.vmem_to_hbm [thread:$0]  %s488, 16, %s485, %s468
        $region40: #{tpu_custom_call.1} parent=27 // pred_fallthru
          _
        // Predicated region
        $region41: #{tpu_custom_call.1} parent=27 // pred_check
          %p491 = pneg %p160
        $region42: #{tpu_custom_call.1} parent=27 // pred_check_branch
          %493 = sbr.rel (%p491) target = $region44
        $region43: #{tpu_custom_call.1} parent=27 // pred_region
          %s495 = ssub.s32 16, 16
          %496 = vsyncadd %s472, %s495
          %s497 = smul.addr %s26, 16
          %s498 = scalar_lea.hbm %s4, %s497
          %s500 = sshll.u32 %s474, 4
          %s501 = int_to_ptr.vmem [resolvable:$true] %s500
          %503 = dma.vmem_to_hbm [thread:$0]  %s501, 16, %s498, %s472
        $region44: #{tpu_custom_call.1} parent=27 // pred_fallthru
          _
      $region28: #{tpu_custom_call.1} parent=5 // pred_fallthru
        _
      %p504 = scmp.le.s32.totalorder 2, %s17
      // Predicated region
      $region45: #{tpu_custom_call.1} parent=5 // pred_check
        %p505 = pneg %p504
      $region46: #{tpu_custom_call.1} parent=5 // pred_check_branch
        %507 = sbr.rel (%p505) target = $region48
      $region47: #{tpu_custom_call.1} parent=5 // pred_region
        %s508 = ssub.s32 %s17, 2
        // Predicated region
        $region49: #{tpu_custom_call.1} parent=47 // pred_check
          %p509 = pneg %p114
        $region50: #{tpu_custom_call.1} parent=47 // pred_check_branch
          %511 = sbr.rel (%p509) target = $region52
        $region51: #{tpu_custom_call.1} parent=47 // pred_region
          %p512 = scmp.lt.s32.totalorder %s28, 1
          %s513 = scalar_select %p512, %s28, 1
          %s514 = scalar_lea.vmem %s2, %s513
        $region52: #{tpu_custom_call.1} parent=47 // pred_fallthru
          _
        // Predicated region
        $region53: #{tpu_custom_call.1} parent=47 // pred_check
          %p515 = pneg %p140
        $region54: #{tpu_custom_call.1} parent=47 // pred_check_branch
          %517 = sbr.rel (%p515) target = $region56
        $region55: #{tpu_custom_call.1} parent=47 // pred_region
          %s518 = sand.u32 %s125, 1
          %s519 = scalar_lea.sflag [#allocation3], %s518
          %s520 = sand.u32 %s125, 1
          %s521 = scalar_lea.vmem [#allocation2], %s520
          %522 = dma.done %s519, 16
        $region56: #{tpu_custom_call.1} parent=47 // pred_fallthru
          _
        // Predicated region
        $region57: #{tpu_custom_call.1} parent=47 // pred_check
          %p523 = pneg %p166
        $region58: #{tpu_custom_call.1} parent=47 // pred_check_branch
          %525 = sbr.rel (%p523) target = $region60
        $region59: #{tpu_custom_call.1} parent=47 // pred_region
          %s526 = sand.u32 %s151, 1
          %s527 = scalar_lea.sflag [#allocation5], %s526
          %s528 = sand.u32 %s151, 1
          %s529 = scalar_lea.vmem [#allocation4], %s528
          %530 = dma.done %s527, 16
        $region60: #{tpu_custom_call.1} parent=47 // pred_fallthru
          _
      $region48: #{tpu_custom_call.1} parent=5 // pred_fallthru
        _
    $region6: #{tpu_custom_call.1} parent=1 // loop_footer
      %s21 = sadd.s32 1, %s17
    $region7: #{tpu_custom_call.1} parent=1 // loop_footer_branch
      %16 = sbr.rel target = $region3
    $region8: #{tpu_custom_call.1} parent=1 // loop_exit
      _
    %531 = vsyncpa [#allocation3], 1
    %s532 = scalar_lea.sflag [#allocation3], 1
    %533 = vsyncpa %s532, 1
    %534 = vsyncpa [#allocation5], 1
    %s535 = scalar_lea.sflag [#allocation5], 1
    %536 = vsyncpa %s535, 1

</llo_original>
